<compile_context>
chip_gen: v5e
topology: v5e:2x2
jax: 0.10.0
libtpu: 0.0.40
codegen_flags: <defaults>
</compile_context>

<pallas_src>
import math
from functools import partial

import jax
import jax.numpy as jnp
import numpy as np
from jax.experimental import pallas as pl
from jax.experimental.pallas import tpu as pltpu


# ------------------------------ tiling helper -------------------------------

def _pick_tile(n, target):
    """Largest tile <= target that evenly divides n (multiple of 8), else n."""
    if n <= target:
        return n
    t = target - (target % 8) if target % 8 else target
    for cand in range(t, 7, -8):
        if n % cand == 0:
            return cand
    return n


# ----------------------------- Pallas kernels ------------------------------

def _linear_kernel(x_ref, wt_ref, b_ref, o_ref, *, dtype):
    # x: (tm, K), wt: (K, Nout), b: (1, Nout) -> o: (tm, Nout)
    y = jnp.dot(x_ref[...].astype(dtype), wt_ref[...].astype(dtype),
                preferred_element_type=jnp.float32) + b_ref[...]
    o_ref[...] = y.astype(o_ref.dtype)


def _linear_ln_kernel(x_ref, wt_ref, b_ref, g_ref, beta_ref, o_ref, *, eps, dtype):
    # fused:  y = x @ wt + b ; o = LayerNorm(y) * g + beta     (LN over channels)
    y = jnp.dot(x_ref[...].astype(dtype), wt_ref[...].astype(dtype),
                preferred_element_type=jnp.float32) + b_ref[...]
    mu = jnp.mean(y, axis=-1, keepdims=True)
    var = jnp.mean((y - mu) ** 2, axis=-1, keepdims=True)
    o_ref[...] = ((y - mu) * jax.lax.rsqrt(var + eps) * g_ref[...]
                  + beta_ref[...]).astype(o_ref.dtype)


def _attn_kernel(q_ref, kv_ref, o_ref, m_sc, l_sc, acc_sc, *,
                 num_heads, head_dim, dtype):
    """Flash-style streaming attention over the KV axis (grid axis 2).

    q_ref  : (1, tn, C)   -- C = num_heads * head_dim, scale already folded in
    kv_ref : (1, tk, 2C)  -- [:, :C] = k, [:, C:] = v
    o_ref  : (1, tn, C)   -- lane-dense output, head h -> cols [h*hd, (h+1)*hd)
    scratch: m_sc/l_sc (tn, num_heads) f32, acc_sc (tn, C) f32
    """
    ki = pl.program_id(2)
    C = num_heads * head_dim
    approx = dtype != jnp.float32

    @pl.when(ki == 0)
    def _():
        m_sc[...] = jnp.full_like(m_sc, -jnp.inf)
        l_sc[...] = jnp.zeros_like(l_sc)
        acc_sc[...] = jnp.zeros_like(acc_sc)

    q = q_ref[0]        # (tn, C)
    kv = kv_ref[0]      # (tk, 2C)

    for h in range(num_heads):                       # static unroll over heads
        lo, hi = h * head_dim, (h + 1) * head_dim
        qh = q[:, lo:hi]                             # (tn, hd)
        kh = kv[:, lo:hi]                            # (tk, hd)
        vh = kv[:, C + lo:C + hi]                    # (tk, hd)

        s = jnp.dot(qh.astype(dtype), kh.astype(dtype).T,
                    preferred_element_type=jnp.float32)          # (tn, tk)

        m_prev = m_sc[:, h:h + 1]                                # (tn, 1)
        m_new = jnp.maximum(m_prev, jnp.max(s, axis=-1, keepdims=True))
        alpha = jnp.exp(m_prev - m_new)
        p = jnp.exp(s - m_new)                                   # (tn, tk)

        l_sc[:, h:h + 1] = alpha * l_sc[:, h:h + 1] + jnp.sum(p, axis=-1,
                                                              keepdims=True)
        acc_sc[:, lo:hi] = (alpha * acc_sc[:, lo:hi]
                            + jnp.dot(p.astype(dtype), vh.astype(dtype),
                                      preferred_element_type=jnp.float32))
        m_sc[:, h:h + 1] = m_new

    @pl.when(ki == pl.num_programs(2) - 1)
    def _():
        for h in range(num_heads):
            lo, hi = h * head_dim, (h + 1) * head_dim
            inv = pl.reciprocal(l_sc[:, h:h + 1], approx=approx)
            o_ref[0, :, lo:hi] = (acc_sc[:, lo:hi] * inv).astype(o_ref.dtype)


# ------------------------------ Pallas wrappers -----------------------------

def pallas_linear(x, wt, b, *, dtype=jnp.float32, tile_m=256):
    """y = x @ wt + b   ;  x:(M,K)  wt:(K,Nout)  b:(Nout,)  (wt pre-transposed)."""
    M, K = x.shape
    Nout = wt.shape[1]
    tm = _pick_tile(M, tile_m)
    return pl.pallas_call(
        partial(_linear_kernel, dtype=dtype),
        out_shape=jax.ShapeDtypeStruct((M, Nout), jnp.float32),
        grid=(M // tm,),
        in_specs=[
            pl.BlockSpec((tm, K), lambda i: (i, 0)),
            pl.BlockSpec((K, Nout), lambda i: (0, 0)),
            pl.BlockSpec((1, Nout), lambda i: (0, 0)),
        ],
        out_specs=pl.BlockSpec((tm, Nout), lambda i: (i, 0)),
        compiler_params=pltpu.CompilerParams(dimension_semantics=("parallel",)),
    )(x, wt, b.reshape(1, Nout))


def pallas_linear_layernorm(x, wt, b, gamma, beta, *, eps=1e-5,
                            dtype=jnp.float32, tile_m=256):
    """Fused (x @ wt + b) followed by LayerNorm over the output channels."""
    M, K = x.shape
    Nout = wt.shape[1]
    tm = _pick_tile(M, tile_m)
    return pl.pallas_call(
        partial(_linear_ln_kernel, eps=eps, dtype=dtype),
        out_shape=jax.ShapeDtypeStruct((M, Nout), jnp.float32),
        grid=(M // tm,),
        in_specs=[
            pl.BlockSpec((tm, K), lambda i: (i, 0)),
            pl.BlockSpec((K, Nout), lambda i: (0, 0)),
            pl.BlockSpec((1, Nout), lambda i: (0, 0)),
            pl.BlockSpec((1, Nout), lambda i: (0, 0)),
            pl.BlockSpec((1, Nout), lambda i: (0, 0)),
        ],
        out_specs=pl.BlockSpec((tm, Nout), lambda i: (i, 0)),
        compiler_params=pltpu.CompilerParams(dimension_semantics=("parallel",)),
    )(x, wt, b.reshape(1, Nout), gamma.reshape(1, Nout), beta.reshape(1, Nout))


def pallas_attention(q, kv, *, num_heads, cross, dtype=jnp.float32,
                     tile_n=128, tile_k=128):
    """q:(B,N,C) (scale folded in), kv:(B,M,2C)  ->  (B,N,C) lane-dense output."""
    B, N, C = q.shape
    M = kv.shape[1]
    hd = C // num_heads
    tn = _pick_tile(N, tile_n)
    tk = _pick_tile(M, tile_k)
    half = B // 2

    def q_index(b, qi, ki):
        return (b, qi, 0)

    def kv_index(b, qi, ki):
        if cross:
            # q of batch b attends k/v of the other batch half (index remap --
            # no HBM copy of k/v).
            return ((b + half) % B, ki, 0)
        return (b, ki, 0)

    return pl.pallas_call(
        partial(_attn_kernel, num_heads=num_heads, head_dim=hd, dtype=dtype),
        out_shape=jax.ShapeDtypeStruct((B, N, C), jnp.float32),
        grid_spec=pltpu.PrefetchScalarGridSpec(
            num_scalar_prefetch=0,
            grid=(B, N // tn, M // tk),
            in_specs=[
                pl.BlockSpec((1, tn, C), q_index),
                pl.BlockSpec((1, tk, 2 * C), kv_index),
            ],
            out_specs=pl.BlockSpec((1, tn, C), q_index),
            scratch_shapes=[
                pltpu.VMEM((tn, num_heads), jnp.float32),   # running max
                pltpu.VMEM((tn, num_heads), jnp.float32),   # running sum
                pltpu.VMEM((tn, C), jnp.float32),           # accumulator
            ],
        ),
        compiler_params=pltpu.CompilerParams(
            dimension_semantics=("parallel", "parallel", "arbitrary")),
    )(q, kv)


# ----------------------------- module forward -------------------------------

def prepare_params(params, *, num_heads, sr_ratio, matmul_dtype=jnp.float32):
    """One-time preprocessing: transpose weights to (K, Nout), fold the
    attention scale into the q projection, optionally cast weights for the MXU."""
    C = params["q_w"].shape[0]
    hd = C // num_heads
    scale = hd ** (-0.5)
    wdt = matmul_dtype
    prep = {
        "q_wt": (params["q_w"].T * scale).astype(wdt),
        "q_b": params["q_b"] * scale,
        "kv_wt": params["kv_w"].T.astype(wdt),
        "kv_b": params["kv_b"],
        "proj_wt": params["proj_w"].T.astype(wdt),
        "proj_b": params["proj_b"],
    }
    if sr_ratio > 1:
        prep["sr_wt"] = params["sr_w_flat"].T.astype(wdt)   # (C*sr*sr, C)
        prep["sr_b"] = params["sr_b"]
        prep["ln_g"] = params["ln_g"]
        prep["ln_b"] = params["ln_b"]
    return prep


def attention_forward(prep, x, H, W, *, num_heads, sr_ratio, cross,
                      matmul_dtype=jnp.float32):
    """Pallas implementation of Attention.forward (dropout p=0 -> identity)."""
    B, N, C = x.shape
    x2 = x.reshape(B * N, C)

    # q projection (scale already folded into the weights)
    q = pallas_linear(x2, prep["q_wt"], prep["q_b"], dtype=matmul_dtype)
    q = q.reshape(B, N, C)

    # kv source (optionally spatially reduced)
    if sr_ratio > 1:
        sr = sr_ratio
        Hs, Ws = H // sr, W // sr
        # conv(k=sr, stride=sr) == patch-flatten matmul; LayerNorm fused in.
        x4 = x.reshape(B, H, W, C)
        patches = (
            x4.reshape(B, Hs, sr, Ws, sr, C)
            .transpose(0, 1, 3, 5, 2, 4)                    # (B,Hs,Ws,C,sr,sr)
            .reshape(B * Hs * Ws, C * sr * sr)
        )
        kv_src = pallas_linear_layernorm(
            patches, prep["sr_wt"], prep["sr_b"], prep["ln_g"], prep["ln_b"],
            dtype=matmul_dtype)
        M = Hs * Ws
    else:
        M = N
        kv_src = x2

    kv = pallas_linear(kv_src, prep["kv_wt"], prep["kv_b"], dtype=matmul_dtype)
    kv = kv.reshape(B, M, 2 * C)                            # packed (k | v)

    # flash-style attention, heads sliced in-kernel, output already (B, N, C)
    out = pallas_attention(q, kv, num_heads=num_heads, cross=cross,
                           dtype=matmul_dtype)

    out = pallas_linear(out.reshape(B * N, C), prep["proj_wt"], prep["proj_b"],
                        dtype=matmul_dtype)
    return out.reshape(B, N, C)


# --------------------------- pure-JAX reference ------------------------------

def reference_forward(params, x, H, W, *, num_heads, sr_ratio, cross):
    B, N, C = x.shape
    hd = C // num_heads
    scale = hd ** (-0.5)

    q = x @ params["q_w"].T + params["q_b"]
    q = q.reshape(B, N, num_heads, hd).transpose(0, 2, 1, 3)

    if sr_ratio > 1:
        sr = sr_ratio
        x_ = jnp.transpose(x, (0, 2, 1)).reshape(B, C, H, W)
        x_ = jax.lax.conv_general_dilated(
            x_, params["sr_w4"], (sr, sr), "VALID",
            dimension_numbers=("NCHW", "OIHW", "NCHW"),
        ) + params["sr_b"].reshape(1, C, 1, 1)
        x_ = x_.reshape(B, C, -1).transpose(0, 2, 1)
        mu = x_.mean(-1, keepdims=True)
        var = ((x_ - mu) ** 2).mean(-1, keepdims=True)
        x_ = (x_ - mu) / jnp.sqrt(var + 1e-5) * params["ln_g"] + params["ln_b"]
        kv_src = x_
    else:
        kv_src = x

    M = kv_src.shape[1]
    kv = kv_src @ params["kv_w"].T + params["kv_b"]
    kv = kv.reshape(B, M, 2, num_heads, hd).transpose(2, 0, 3, 1, 4)
    k, v = kv[0], kv[1]

    if cross:
        MiniB = B // 2
        k = jnp.concatenate([k[MiniB:], k[:MiniB]], axis=0)
        v = jnp.concatenate([v[MiniB:], v[:MiniB]], axis=0)

    attn = (q @ jnp.swapaxes(k, -2, -1)) * scale
    attn = jax.nn.softmax(attn, axis=-1)
    out = (attn @ v).transpose(0, 2, 1, 3).reshape(B, N, C)
    out = out @ params["proj_w"].T + params["proj_b"]
    return out


# --------------------------------- setup -------------------------------------

def init_params(key, dim, num_heads, sr_ratio, qkv_bias=False):
    ks = jax.random.split(key, 8)

    def lin(kw, kb, out_f, in_f, bias):
        bound = 1.0 / math.sqrt(in_f)
        w = jax.random.uniform(kw, (out_f, in_f), jnp.float32, -bound, bound)
        if bias:
            b = jax.random.uniform(kb, (out_f,), jnp.float32, -bound, bound)
        else:
            b = jnp.zeros((out_f,), jnp.float32)
        return w, b

    p = {}
    p["q_w"], p["q_b"] = lin(ks[0], ks[1], dim, dim, qkv_bias)
    p["kv_w"], p["kv_b"] = lin(ks[2], ks[3], 2 * dim, dim, qkv_bias)
    p["proj_w"], p["proj_b"] = lin(ks[4], ks[5], dim, dim, True)
    if sr_ratio > 1:
        fan_in = dim * sr_ratio * sr_ratio
        bound = 1.0 / math.sqrt(fan_in)
        w4 = jax.random.uniform(ks[6], (dim, dim, sr_ratio, sr_ratio),
                                jnp.float32, -bound, bound)
        p["sr_w4"] = w4
        p["sr_w_flat"] = w4.reshape(dim, fan_in)      # (C_out, C_in*sr*sr)
        p["sr_b"] = jax.random.uniform(ks[7], (dim,), jnp.float32, -bound, bound)
        p["ln_g"] = jnp.ones((dim,), jnp.float32)
        p["ln_b"] = jnp.zeros((dim,), jnp.float32)
    return p


if __name__ == "__main__":
    B, H, W, C = 2, 8, 8, 32
    N = H * W
    num_heads = 8

    key = jax.random.PRNGKey(0)
    kx, kp1, kp2 = jax.random.split(key, 3)
    x = jax.random.normal(kx, (B, N, C), jnp.float32)

    configs = [
        dict(sr_ratio=1, cross=False),
        dict(sr_ratio=2, cross=True),
    ]
    pkeys = [kp1, kp2]

    ok = True
    for cfg, pk in zip(configs, pkeys):
        params = init_params(pk, C, num_heads, cfg["sr_ratio"])
        ref = np.asarray(jax.block_until_ready(
            reference_forward(params, x, H, W, num_heads=num_heads, **cfg)))

        # f32 matmul path: strict parity with the PyTorch math
        prep32 = prepare_params(params, num_heads=num_heads,
                                sr_ratio=cfg["sr_ratio"],
                                matmul_dtype=jnp.float32)
        out32 = attention_forward(prep32, x, H, W, num_heads=num_heads,
                                  matmul_dtype=jnp.float32, **cfg)
        out32 = np.asarray(jax.block_until_ready(out32))
        if not np.allclose(out32, ref, atol=2e-4, rtol=2e-4):
            ok = False
            print(f"MISMATCH (f32) for config {cfg}: "
                  f"max err {np.max(np.abs(out32 - ref))}")

        # bf16 MXU fast path (v5e/v6e/v7x): f32 accumulation, looser tolerance
        prepbf = prepare_params(params, num_heads=num_heads,
                                sr_ratio=cfg["sr_ratio"],
                                matmul_dtype=jnp.bfloat16)
        outbf = attention_forward(prepbf, x, H, W, num_heads=num_heads,
                                  matmul_dtype=jnp.bfloat16, **cfg)
        outbf = np.asarray(jax.block_until_ready(outbf))
        if not np.allclose(outbf, ref, atol=1e-1, rtol=1e-1):
            ok = False
            print(f"MISMATCH (bf16) for config {cfg}: "
                  f"max err {np.max(np.abs(outbf - ref))}")

    if ok:
        print("KERNEL_OK")
</pallas_src>

<mosaic_0001>
module attributes {stable_mosaic.version = 11 : i64} {
  func.func @_linear_kernel(%arg0: i32, %arg1: memref<128x32xf32, #tpu.memory_space<vmem>>, %arg2: memref<32x32xf32, #tpu.memory_space<vmem>>, %arg3: memref<1x32xf32, #tpu.memory_space<vmem>>, %arg4: memref<128x32xf32, #tpu.memory_space<vmem>>) attributes {dimension_semantics = [#tpu.dimension_semantics<parallel>], iteration_bounds = array<i64: 1>, scalar_prefetch = 0 : i64, scratch_operands = 0 : i64, tpu.core_type = #tpu.core_type<tc>, window_params = [{transform_indices = @transform_0, window_bounds = array<i64: 128, 32>}, {pipeline_mode = #tpu.pipeline_mode<synchronous>, transform_indices = @transform_1, window_bounds = array<i64: 32, 32>}, {pipeline_mode = #tpu.pipeline_mode<synchronous>, transform_indices = @transform_2, window_bounds = array<i64: 1, 32>}, {transform_indices = @transform_3, window_bounds = array<i64: 128, 32>}]} {
    %c0 = arith.constant 0 : index
    %c0_0 = arith.constant 0 : index
    %0 = vector.load %arg1[%c0, %c0_0] : memref<128x32xf32, #tpu.memory_space<vmem>>, vector<128x32xf32>
    %c0_1 = arith.constant 0 : index
    %c0_2 = arith.constant 0 : index
    %1 = vector.load %arg2[%c0_1, %c0_2] : memref<32x32xf32, #tpu.memory_space<vmem>>, vector<32x32xf32>
    %cst = arith.constant dense<0.000000e+00> : vector<128x32xf32>
    %2 = tpu.matmul %0, %1, %cst {dimension_numbers = #tpu.dot_dimension_numbers<[1], [0], [0], [1], [0, 0, 1, 1], [], []>} : vector<128x32xf32>, vector<32x32xf32>, vector<128x32xf32> -> vector<128x32xf32>
    %c0_3 = arith.constant 0 : index
    %c0_4 = arith.constant 0 : index
    %3 = vector.load %arg3[%c0_3, %c0_4] : memref<1x32xf32, #tpu.memory_space<vmem>>, vector<1x32xf32>
    %4 = vector.broadcast %3 : vector<1x32xf32> to vector<128x32xf32>
    %5 = arith.addf %2, %4 : vector<128x32xf32>
    %c0_5 = arith.constant 0 : index
    %c0_6 = arith.constant 0 : index
    %6 = vector.load %arg4[%c0_5, %c0_6] : memref<128x32xf32, #tpu.memory_space<vmem>>, vector<128x32xf32>
    tpu.vector_store %arg4[%c0_5, %c0_6], %5 {strides = array<i32>} : memref<128x32xf32, #tpu.memory_space<vmem>>, vector<128x32xf32>,
    return
  }
  func.func @transform_0(%arg0: i32) -> (i32, i32) {
    %c0_i32 = arith.constant 0 : i32
    %c0_i32_0 = arith.constant 0 : i32
    return %arg0, %c0_i32 : i32, i32
  }
  func.func @transform_1(%arg0: i32) -> (i32, i32) {
    %c0_i32 = arith.constant 0 : i32
    %c0_i32_0 = arith.constant 0 : i32
    %c0_i32_1 = arith.constant 0 : i32
    return %c0_i32, %c0_i32_0 : i32, i32
  }
  func.func @transform_2(%arg0: i32) -> (i32, i32) {
    %c0_i32 = arith.constant 0 : i32
    %c0_i32_0 = arith.constant 0 : i32
    %c0_i32_1 = arith.constant 0 : i32
    return %c0_i32, %c0_i32_0 : i32, i32
  }
  func.func @transform_3(%arg0: i32) -> (i32, i32) {
    %c0_i32 = arith.constant 0 : i32
    %c0_i32_0 = arith.constant 0 : i32
    return %arg0, %c0_i32 : i32, i32
  }
}

</mosaic_0001>

<llo_original>
// kernel: tpu_custom_call.1
$region0: #{tpu_custom_call.1}
  #allocation0 [shape = 'u32[]', space=smem, size = 0x4, offset = 0x4, fixed_abs, tag = 'smem constant byte address 0x4 - core index']
  #allocation1 [shape = 'u32[72,128]{1,0:T(1,128)}', space=vmem, size = 0x9000, scoped, tag = 'internal scratch']
  %s0 = inlined_call_operand.vmem [shape: f32[128,32], index: 0, kind: input, shape index: {}]
  %s1 = inlined_call_operand.vmem [shape: f32[32,32], index: 1, kind: input, shape index: {}]
  %s2 = inlined_call_operand.vmem [shape: f32[1,32], index: 2, kind: input, shape index: {}]
  %s3 = inlined_call_operand.vmem [shape: f32[128,32], index: 3, kind: output, shape index: {}]
  %s4 = sld [smem:[#allocation0]]
  $region22: #{tpu_custom_call.1} parent=0
    _
  %s6 = ssub.s32 1, %s4
  %s7 = scalar_select 0, %s6, %s4
  // Predicated region
  $region2: #{tpu_custom_call.1} parent=0 // pred_check
    _
  $region3: #{tpu_custom_call.1} parent=0 // pred_check_branch
    %9 = sbr.rel (0) target = $region5
  $region4: #{tpu_custom_call.1} parent=0 // pred_region
    _
  $region5: #{tpu_custom_call.1} parent=0 // pred_fallthru
    _
  // Predicated region
  $region6: #{tpu_custom_call.1} parent=0 // pred_check
    _
  $region7: #{tpu_custom_call.1} parent=0 // pred_check_branch
    %11 = sbr.rel (0) target = $region9
  $region8: #{tpu_custom_call.1} parent=0 // pred_region
    _
  $region9: #{tpu_custom_call.1} parent=0 // pred_fallthru
    _
  // Predicated region
  $region10: #{tpu_custom_call.1} parent=0 // pred_check
    _
  $region11: #{tpu_custom_call.1} parent=0 // pred_check_branch
    %13 = sbr.rel (0) target = $region13
  $region12: #{tpu_custom_call.1} parent=0 // pred_region
    _
  $region13: #{tpu_custom_call.1} parent=0 // pred_fallthru
    _
  %v14 = vld [vmem:[%s0] sm:$0xff]
  %v15 = vld [vmem:[%s0 + $0x8] sm:$0xff]
  %v16 = vld [vmem:[%s0 + $0x10] sm:$0xff]
  %v17 = vld [vmem:[%s0 + $0x18] sm:$0xff]
  %v18 = vld [vmem:[%s0 + $0x20] sm:$0xff]
  %v19 = vld [vmem:[%s0 + $0x28] sm:$0xff]
  %v20 = vld [vmem:[%s0 + $0x30] sm:$0xff]
  %v21 = vld [vmem:[%s0 + $0x38] sm:$0xff]
  %v22 = vld [vmem:[%s0 + $0x40] sm:$0xff]
  %v23 = vld [vmem:[%s0 + $0x48] sm:$0xff]
  %v24 = vld [vmem:[%s0 + $0x50] sm:$0xff]
  %v25 = vld [vmem:[%s0 + $0x58] sm:$0xff]
  %v26 = vld [vmem:[%s0 + $0x60] sm:$0xff]
  %v27 = vld [vmem:[%s0 + $0x68] sm:$0xff]
  %v28 = vld [vmem:[%s0 + $0x70] sm:$0xff]
  %v29 = vld [vmem:[%s0 + $0x78] sm:$0xff]
  %v30 = vld [vmem:[%s1] sm:$0xff]
  %v31 = vld [vmem:[%s1 + $0x8] sm:$0xff]
  %v32 = vld [vmem:[%s1 + $0x10] sm:$0xff]
  %v33 = vld [vmem:[%s1 + $0x18] sm:$0xff]
  %v34 = vld [vmem:[%s2] sm:$0x1]
  %v36 = vperm.slane %v34, 0
  %vm38 = vcmask 261120
  %v40 = vsel %vm38, %v14, 0
  %v43 = vsel %vm38, %v15, 0
  %v46 = vsel %vm38, %v16, 0
  %v49 = vsel %vm38, %v17, 0
  %v52 = vsel %vm38, %v18, 0
  %v55 = vsel %vm38, %v19, 0
  %v58 = vsel %vm38, %v20, 0
  %v61 = vsel %vm38, %v21, 0
  %v64 = vsel %vm38, %v22, 0
  %v67 = vsel %vm38, %v23, 0
  %v70 = vsel %vm38, %v24, 0
  %v73 = vsel %vm38, %v25, 0
  %v76 = vsel %vm38, %v26, 0
  %v79 = vsel %vm38, %v27, 0
  %v82 = vsel %vm38, %v28, 0
  %v85 = vsel %vm38, %v29, 0
  %87 = vmatpush.msra.mxu0 0.0
  %88 = vmatpush.msra.mxu0 0.0
  %89 = vmatpush.msra.mxu0 0.0
  %90 = vmatpush.msra.mxu0 0.0
  %91 = vmatpush.msra.mxu0 0.0
  %92 = vmatpush.msra.mxu0 0.0
  %93 = vmatpush.msra.mxu0 0.0
  %94 = vmatpush.msra.mxu0 0.0
  %95 = vmatpush.msra.mxu0 0.0
  %96 = vmatpush.msra.mxu0 0.0
  %97 = vmatpush.msra.mxu0 0.0
  %98 = vmatpush.msra.mxu0 0.0
  %99 = vmatpush.msra.mxu0 %v33
  %100 = vmatpush.msra.mxu0 %v32
  %101 = vmatpush.msra.mxu0 %v31
  %102 = vmatpush.msra.mxu0 %v30
  %103 = vmatmul.f32.gmra.mxu0 %v40
  %v104 = vpop.f32.mrf.mxu0
  %v105 = vadd.f32 %v36, %v104
  %106 = vmatmul.f32.gmra.mxu0 %v43
  %v107 = vpop.f32.mrf.mxu0
  %v108 = vadd.f32 %v36, %v107
  %109 = vmatmul.f32.gmra.mxu0 %v46
  %v110 = vpop.f32.mrf.mxu0
  %v111 = vadd.f32 %v36, %v110
  %112 = vmatmul.f32.gmra.mxu0 %v49
  %v113 = vpop.f32.mrf.mxu0
  %v114 = vadd.f32 %v36, %v113
  %115 = vmatmul.f32.gmra.mxu0 %v52
  %v116 = vpop.f32.mrf.mxu0
  %v117 = vadd.f32 %v36, %v116
  %118 = vmatmul.f32.gmra.mxu0 %v55
  %v119 = vpop.f32.mrf.mxu0
  %v120 = vadd.f32 %v36, %v119
  %121 = vmatmul.f32.gmra.mxu0 %v58
  %v122 = vpop.f32.mrf.mxu0
  %v123 = vadd.f32 %v36, %v122
  %124 = vmatmul.f32.gmra.mxu0 %v61
  %v125 = vpop.f32.mrf.mxu0
  %v126 = vadd.f32 %v36, %v125
  %127 = vmatmul.f32.gmra.mxu0 %v64
  %v128 = vpop.f32.mrf.mxu0
  %v129 = vadd.f32 %v36, %v128
  %130 = vmatmul.f32.gmra.mxu0 %v67
  %v131 = vpop.f32.mrf.mxu0
  %v132 = vadd.f32 %v36, %v131
  %133 = vmatmul.f32.gmra.mxu0 %v70
  %v134 = vpop.f32.mrf.mxu0
  %v135 = vadd.f32 %v36, %v134
  %136 = vmatmul.f32.gmra.mxu0 %v73
  %v137 = vpop.f32.mrf.mxu0
  %v138 = vadd.f32 %v36, %v137
  %139 = vmatmul.f32.gmra.mxu0 %v76
  %v140 = vpop.f32.mrf.mxu0
  %v141 = vadd.f32 %v36, %v140
  %142 = vmatmul.f32.gmra.mxu0 %v79
  %v143 = vpop.f32.mrf.mxu0
  %v144 = vadd.f32 %v36, %v143
  %145 = vmatmul.f32.gmra.mxu0 %v82
  %v146 = vpop.f32.mrf.mxu0
  %v147 = vadd.f32 %v36, %v146
  %148 = vmatmul.f32.gmra.mxu0 %v85
  %v149 = vpop.f32.mrf.mxu0
  %v150 = vadd.f32 %v36, %v149
  %151 = vdwg.mxu0
  %152 = vst.msk [vmem:[%s3] sm:$0xff] %vm38, %v105
  %153 = vst.msk [vmem:[%s3 + $0x8] sm:$0xff] %vm38, %v108
  %154 = vst.msk [vmem:[%s3 + $0x10] sm:$0xff] %vm38, %v111
  %155 = vst.msk [vmem:[%s3 + $0x18] sm:$0xff] %vm38, %v114
  %156 = vst.msk [vmem:[%s3 + $0x20] sm:$0xff] %vm38, %v117
  %157 = vst.msk [vmem:[%s3 + $0x28] sm:$0xff] %vm38, %v120
  %158 = vst.msk [vmem:[%s3 + $0x30] sm:$0xff] %vm38, %v123
  %159 = vst.msk [vmem:[%s3 + $0x38] sm:$0xff] %vm38, %v126
  %160 = vst.msk [vmem:[%s3 + $0x40] sm:$0xff] %vm38, %v129
  %161 = vst.msk [vmem:[%s3 + $0x48] sm:$0xff] %vm38, %v132
  %162 = vst.msk [vmem:[%s3 + $0x50] sm:$0xff] %vm38, %v135
  %163 = vst.msk [vmem:[%s3 + $0x58] sm:$0xff] %vm38, %v138
  %164 = vst.msk [vmem:[%s3 + $0x60] sm:$0xff] %vm38, %v141
  %165 = vst.msk [vmem:[%s3 + $0x68] sm:$0xff] %vm38, %v144
  %166 = vst.msk [vmem:[%s3 + $0x70] sm:$0xff] %vm38, %v147
  %167 = vst.msk [vmem:[%s3 + $0x78] sm:$0xff] %vm38, %v150
  // Predicated region
  $region14: #{tpu_custom_call.1} parent=0 // pred_check
    _
  $region15: #{tpu_custom_call.1} parent=0 // pred_check_branch
    %169 = sbr.rel (0) target = $region17
  $region16: #{tpu_custom_call.1} parent=0 // pred_region
    _
  $region17: #{tpu_custom_call.1} parent=0 // pred_fallthru
    _
  // Predicated region
  $region18: #{tpu_custom_call.1} parent=0 // pred_check
    _
  $region19: #{tpu_custom_call.1} parent=0 // pred_check_branch
    %171 = sbr.rel (0) target = $region21
  $region20: #{tpu_custom_call.1} parent=0 // pred_region
    _
  $region21: #{tpu_custom_call.1} parent=0 // pred_fallthru
    _

</llo_original>
